<compile_context>
chip_gen: v7x
topology: tpu7x:2x2x1
jax: 0.10.0
libtpu: 0.0.40
codegen_flags: <defaults>
</compile_context>

<pallas_src>
import functools
import math

import jax
import jax.numpy as jnp
from jax import lax
from jax.experimental import pallas as pl
from jax.experimental.pallas import tpu as pltpu


def _stixel_head_kernel(x_ref, wq_ref, bq_ref, wk_ref, bk_ref, wv_ref, bv_ref,
                        wra_ref, wrx_ref, br_ref, gamma_ref, beta_ref,
                        out_ref, *, win, out_dim, eps):
    m, _ = x_ref.shape                     # m = TB * win rows, whole batches only
    x = x_ref[...]                         # (M, C) bf16

    # ---- Q / K / V projections (MXU, bf16 in / f32 accumulate). --------------
    # Wq and bq are pre-scaled by 1/sqrt(feature_dim) in the wrapper.
    q = jnp.dot(x, wq_ref[...], preferred_element_type=jnp.float32) + bq_ref[...]
    k = jnp.dot(x, wk_ref[...], preferred_element_type=jnp.float32) + bk_ref[...]
    v = jnp.dot(x, wv_ref[...], preferred_element_type=jnp.float32) + bv_ref[...]

    # ---- window-3 attention as 3 taps (left / centre / right neighbour). -----
    # Rolls are over the flattened row axis; any row whose tap would wrap across
    # a batch seam (or the block boundary) is exactly an edge-masked row below.
    k_prev = pltpu.roll(k, shift=1, axis=0)        # row i -> k[i-1]
    k_next = pltpu.roll(k, shift=m - 1, axis=0)    # row i -> k[i+1]
    v_prev = pltpu.roll(v, shift=1, axis=0)
    v_next = pltpu.roll(v, shift=m - 1, axis=0)

    s_l = jnp.sum(q * k_prev, axis=-1, keepdims=True)   # (M, 1)
    s_m = jnp.sum(q * k,      axis=-1, keepdims=True)
    s_r = jnp.sum(q * k_next, axis=-1, keepdims=True)

    col = lax.broadcasted_iota(jnp.int32, (m, 1), 0) % win
    s_l = jnp.where(col == 0, -jnp.inf, s_l)             # column 0: no left nbr
    s_r = jnp.where(col == win - 1, -jnp.inf, s_r)       # last column: no right nbr

    mx = jnp.maximum(jnp.maximum(s_l, s_r), s_m)          # s_m is always in-window
    e_l = jnp.exp(s_l - mx)                                # exactly 0 where masked
    e_m = jnp.exp(s_m - mx)
    e_r = jnp.exp(s_r - mx)
    inv = pl.reciprocal(e_l + e_m + e_r, approx=True)      # EUP, off the VALU path
    attn = (e_l * inv) * v_prev + (e_m * inv) * v + (e_r * inv) * v_next   # (M, C)

    # ---- channel_reduce: 1x1 conv on concat([attn, x], channels). ------------
    y = (jnp.dot(attn.astype(jnp.bfloat16), wra_ref[...],
                 preferred_element_type=jnp.float32)
         + jnp.dot(x, wrx_ref[...], preferred_element_type=jnp.float32)
         + br_ref[...])                                    # (M, O_pad); pad lanes = 0

    # ---- LayerNorm2d over the true out_dim channels, then Sigmoid. -----------
    # Padded output lanes hold zeros (zero-padded weights/bias), so lane sums
    # equal sums over the real channels; divide by out_dim, not O_pad.
    inv_o = 1.0 / out_dim
    mean = jnp.sum(y, axis=-1, keepdims=True) * inv_o
    var = jnp.sum(y * y, axis=-1, keepdims=True) * inv_o - mean * mean
    yn = (y - mean) * lax.rsqrt(var + eps)
    out_ref[...] = jax.nn.sigmoid(yn * gamma_ref[...] + beta_ref[...])


def _prepare_params(params, *, feature_dim, o_pad):
    """Fold 1/sqrt(d) into Wq/bq, zero-pad the output axis to o_pad, cast matmul
    operands to bf16 (biases / LayerNorm affine stay f32)."""
    inv_scale = 1.0 / math.sqrt(feature_dim)
    o = params["br"].shape[-1]
    pad = ((0, 0), (0, o_pad - o))
    bf16, f32 = jnp.bfloat16, jnp.float32
    return dict(
        wq=(params["wq"] * inv_scale).astype(bf16),
        bq=(params["bq"] * inv_scale).astype(f32),
        wk=params["wk"].astype(bf16), bk=params["bk"].astype(f32),
        wv=params["wv"].astype(bf16), bv=params["bv"].astype(f32),
        wra=jnp.pad(params["wra"], pad).astype(bf16),
        wrx=jnp.pad(params["wrx"], pad).astype(bf16),
        br=jnp.pad(params["br"], pad).astype(f32),
        gamma=jnp.pad(params["gamma"], pad).astype(f32),
        beta=jnp.pad(params["beta"], pad).astype(f32),
    )


def stixel_head_forward(x_nchw, params, *, width, block_batch=None):
    """x_nchw: (B, C, 1, W_in) float32. Returns (B, 3, out_channels//3, width)."""
    B, C, H, Win = x_nchw.shape
    assert H == 1, "StixelHead expects H == 1 feature maps"
    O = params["br"].shape[-1]
    assert O % 3 == 0, "NN depth does not match, adapt n_channels."
    O_pad = pl.cdiv(O, 128) * 128                         # lane-dense output store

    # Batch tile: fill the MXU M dimension (target ~256 rows = TB*Win at the
    # real sizes; the tiny demo shapes just exercise the tiling machinery).
    TB = block_batch if block_batch is not None else min(B, max(1, pl.cdiv(256, Win)))
    B_pad = pl.cdiv(B, TB) * TB
    M_blk = TB * Win

    x = jnp.transpose(x_nchw[:, :, 0, :], (0, 2, 1))      # (B, Win, C)
    if B_pad != B:
        x = jnp.pad(x, ((0, B_pad - B), (0, 0), (0, 0)))
    x = x.reshape(B_pad * Win, C).astype(jnp.bfloat16)    # row-flattened, bf16

    p = _prepare_params(params, feature_dim=C, o_pad=O_pad)
    kernel = functools.partial(_stixel_head_kernel, win=Win, out_dim=O, eps=1e-6)
    const = lambda shape: pl.BlockSpec(shape, lambda b: (0, 0))   # grid-invariant

    y = pl.pallas_call(
        kernel,
        out_shape=jax.ShapeDtypeStruct((B_pad * Win, O_pad), jnp.float32),
        grid_spec=pltpu.PrefetchScalarGridSpec(
            num_scalar_prefetch=0,
            grid=(B_pad // TB,),
            in_specs=[
                pl.BlockSpec((M_blk, C), lambda b: (b, 0)),       # x rows
                const((C, C)), const((1, C)),                     # Wq (pre-scaled), bq
                const((C, C)), const((1, C)),                     # Wk, bk
                const((C, C)), const((1, C)),                     # Wv, bv
                const((C, O_pad)),                                # Wred[:, :C] (attn half)
                const((C, O_pad)),                                # Wred[:, C:] (x half)
                const((1, O_pad)),                                # conv bias
                const((1, O_pad)),                                # LayerNorm weight
                const((1, O_pad)),                                # LayerNorm bias
            ],
            out_specs=pl.BlockSpec((M_blk, O_pad), lambda b: (b, 0)),
        ),
        compiler_params=pltpu.CompilerParams(
            dimension_semantics=("parallel",),
            vmem_limit_bytes=32 * 1024 * 1024,
        ),
    )(x, p["wq"], p["bq"], p["wk"], p["bk"], p["wv"], p["bv"],
      p["wra"], p["wrx"], p["br"], p["gamma"], p["beta"])

    y = y.reshape(B_pad, Win, O_pad)[:B, :, :O]           # drop batch / lane padding
    # nn.Upsample(size=(1, width), mode='nearest'): src_col = floor(dst * Win / width).
    # Column replication commutes with per-column LayerNorm + Sigmoid (done in-kernel).
    idx = (jnp.arange(width) * Win) // width
    y = jnp.take(y, idx, axis=1)                          # (B, width, O)
    y = jnp.transpose(y, (0, 2, 1))                       # (B, O, width)
    # rearrange 'b (a n) h w -> b a n h w' (a=3), then squeeze(dim=3)
    return y.reshape(B, 3, O // 3, width)


def _reference(x_nchw, params, *, width, bf16_matmuls=False):
    """Pure-JAX reference mirroring the PyTorch forward (per-column loop).
    With bf16_matmuls=True the matmul operands are rounded through bfloat16
    like the kernel, isolating structural errors from intentional MXU quantisation."""
    B, C, H, Win = x_nchw.shape
    cast = ((lambda a: a.astype(jnp.bfloat16).astype(jnp.float32)) if bf16_matmuls
            else (lambda a: a.astype(jnp.float32)))
    x = jnp.transpose(x_nchw[:, :, 0, :], (0, 2, 1)).astype(jnp.float32)   # (B, W, C)
    xq = cast(x)
    scale = math.sqrt(C)
    q = xq @ cast(params["wq"]) + params["bq"][0]
    k = xq @ cast(params["wk"]) + params["bk"][0]
    v = xq @ cast(params["wv"]) + params["bv"][0]
    cols = []
    for i in range(Win):
        l, r = max(0, i - 1), min(Win - 1, i + 1)
        nk, nv = k[:, l:r + 1, :], v[:, l:r + 1, :]
        qu = q[:, i:i + 1, :]
        sc = jnp.einsum("bqc,bkc->bqk", qu, nk) / scale
        wts = jax.nn.softmax(sc, axis=-1)
        cols.append(jnp.einsum("bqk,bkc->bqc", wts, nv)[:, 0, :])
    attn = jnp.stack(cols, axis=1)                                         # (B, W, C)
    y = cast(attn) @ cast(params["wra"]) + xq @ cast(params["wrx"]) + params["br"][0]
    idx = (jnp.arange(width) * Win) // width
    y = y[:, idx, :]                                                       # upsample
    mean = y.mean(-1, keepdims=True)
    var = ((y - mean) ** 2).mean(-1, keepdims=True)
    yn = (y - mean) / jnp.sqrt(var + 1e-6) * params["gamma"][0] + params["beta"][0]
    s = jax.nn.sigmoid(yn)
    O = params["br"].shape[-1]
    return jnp.transpose(s, (0, 2, 1)).reshape(B, 3, O // 3, width)


if __name__ == "__main__":
    B, C, Win = 4, 32, 8      # batch, in_channels (= ColumnAttention feature_dim), feature width
    O = 12                    # out_channels (must be divisible by 3)
    WIDTH = 16                # Upsample target width

    key = jax.random.PRNGKey(0)
    ks = jax.random.split(key, 12)
    init = lambda k, shape, s=0.1: s * jax.random.normal(k, shape, jnp.float32)
    params = {
        "wq": init(ks[0], (C, C)), "bq": init(ks[1], (1, C)),
        "wk": init(ks[2], (C, C)), "bk": init(ks[3], (1, C)),
        "wv": init(ks[4], (C, C)), "bv": init(ks[5], (1, C)),
        "wra": init(ks[6], (C, O)),   # channel_reduce weights acting on attention half
        "wrx": init(ks[7], (C, O)),   # channel_reduce weights acting on input half
        "br": init(ks[8], (1, O)),
        "gamma": jnp.ones((1, O), jnp.float32) + init(ks[9], (1, O), 0.05),
        "beta": init(ks[10], (1, O), 0.05),
    }
    x = jax.random.normal(ks[11], (B, C, 1, Win), jnp.float32)

    out = jax.block_until_ready(stixel_head_forward(x, params, width=WIDTH, block_batch=2))
    assert out.shape == (B, 3, O // 3, WIDTH), out.shape

    # Tight check vs a reference with matched bf16 matmul operands (verifies the
    # 3-tap attention / masking / LayerNorm structure) ...
    ref_q = jax.block_until_ready(_reference(x, params, width=WIDTH, bf16_matmuls=True))
    err_q = float(jnp.max(jnp.abs(out - ref_q)))
    assert err_q < 5e-3, f"mismatch vs bf16-matched reference: {err_q}"
    # ... and a looser check vs the pure-f32, PyTorch-faithful reference
    # (tolerance reflects the intentional bf16 MXU inputs).
    ref_f = jax.block_until_ready(_reference(x, params, width=WIDTH, bf16_matmuls=False))
    err_f = float(jnp.max(jnp.abs(out - ref_f)))
    assert err_f < 3e-2, f"mismatch vs f32 reference: {err_f}"

    print("KERNEL_OK")
</pallas_src>

<mosaic_0001>
module attributes {stable_mosaic.version = 11 : i64} {
  func.func @_stixel_head_kernel(%arg0: i32, %arg1: memref<16x32xbf16, #tpu.memory_space<vmem>>, %arg2: memref<32x32xbf16, #tpu.memory_space<vmem>>, %arg3: memref<1x32xf32, #tpu.memory_space<vmem>>, %arg4: memref<32x32xbf16, #tpu.memory_space<vmem>>, %arg5: memref<1x32xf32, #tpu.memory_space<vmem>>, %arg6: memref<32x32xbf16, #tpu.memory_space<vmem>>, %arg7: memref<1x32xf32, #tpu.memory_space<vmem>>, %arg8: memref<32x128xbf16, #tpu.memory_space<vmem>>, %arg9: memref<32x128xbf16, #tpu.memory_space<vmem>>, %arg10: memref<1x128xf32, #tpu.memory_space<vmem>>, %arg11: memref<1x128xf32, #tpu.memory_space<vmem>>, %arg12: memref<1x128xf32, #tpu.memory_space<vmem>>, %arg13: memref<16x128xf32, #tpu.memory_space<vmem>>) attributes {dimension_semantics = [#tpu.dimension_semantics<parallel>], iteration_bounds = array<i64: 2>, scalar_prefetch = 0 : i64, scratch_operands = 0 : i64, tpu.core_type = #tpu.core_type<tc>, window_params = [{transform_indices = @transform_0, window_bounds = array<i64: 16, 32>}, {pipeline_mode = #tpu.pipeline_mode<synchronous>, transform_indices = @transform_1, window_bounds = array<i64: 32, 32>}, {pipeline_mode = #tpu.pipeline_mode<synchronous>, transform_indices = @transform_2, window_bounds = array<i64: 1, 32>}, {pipeline_mode = #tpu.pipeline_mode<synchronous>, transform_indices = @transform_3, window_bounds = array<i64: 32, 32>}, {pipeline_mode = #tpu.pipeline_mode<synchronous>, transform_indices = @transform_4, window_bounds = array<i64: 1, 32>}, {pipeline_mode = #tpu.pipeline_mode<synchronous>, transform_indices = @transform_5, window_bounds = array<i64: 32, 32>}, {pipeline_mode = #tpu.pipeline_mode<synchronous>, transform_indices = @transform_6, window_bounds = array<i64: 1, 32>}, {pipeline_mode = #tpu.pipeline_mode<synchronous>, transform_indices = @transform_7, window_bounds = array<i64: 32, 128>}, {pipeline_mode = #tpu.pipeline_mode<synchronous>, transform_indices = @transform_8, window_bounds = array<i64: 32, 128>}, {pipeline_mode = #tpu.pipeline_mode<synchronous>, transform_indices = @transform_9, window_bounds = array<i64: 1, 128>}, {pipeline_mode = #tpu.pipeline_mode<synchronous>, transform_indices = @transform_10, window_bounds = array<i64: 1, 128>}, {pipeline_mode = #tpu.pipeline_mode<synchronous>, transform_indices = @transform_11, window_bounds = array<i64: 1, 128>}, {transform_indices = @transform_12, window_bounds = array<i64: 16, 128>}]} {
    %c0 = arith.constant 0 : index
    %c0_0 = arith.constant 0 : index
    %0 = vector.load %arg1[%c0, %c0_0] : memref<16x32xbf16, #tpu.memory_space<vmem>>, vector<16x32xbf16>
    %c0_1 = arith.constant 0 : index
    %c0_2 = arith.constant 0 : index
    %1 = vector.load %arg2[%c0_1, %c0_2] : memref<32x32xbf16, #tpu.memory_space<vmem>>, vector<32x32xbf16>
    %cst = arith.constant dense<0.000000e+00> : vector<16x32xf32>
    %2 = tpu.matmul %0, %1, %cst {dimension_numbers = #tpu.dot_dimension_numbers<[1], [0], [0], [1], [0, 0, 1, 1], [], []>} : vector<16x32xbf16>, vector<32x32xbf16>, vector<16x32xf32> -> vector<16x32xf32>
    %c0_3 = arith.constant 0 : index
    %c0_4 = arith.constant 0 : index
    %3 = vector.load %arg3[%c0_3, %c0_4] : memref<1x32xf32, #tpu.memory_space<vmem>>, vector<1x32xf32>
    %4 = vector.broadcast %3 : vector<1x32xf32> to vector<16x32xf32>
    %5 = arith.addf %2, %4 : vector<16x32xf32>
    %c0_5 = arith.constant 0 : index
    %c0_6 = arith.constant 0 : index
    %6 = vector.load %arg4[%c0_5, %c0_6] : memref<32x32xbf16, #tpu.memory_space<vmem>>, vector<32x32xbf16>
    %cst_7 = arith.constant dense<0.000000e+00> : vector<16x32xf32>
    %7 = tpu.matmul %0, %6, %cst_7 {dimension_numbers = #tpu.dot_dimension_numbers<[1], [0], [0], [1], [0, 0, 1, 1], [], []>} : vector<16x32xbf16>, vector<32x32xbf16>, vector<16x32xf32> -> vector<16x32xf32>
    %c0_8 = arith.constant 0 : index
    %c0_9 = arith.constant 0 : index
    %8 = vector.load %arg5[%c0_8, %c0_9] : memref<1x32xf32, #tpu.memory_space<vmem>>, vector<1x32xf32>
    %9 = vector.broadcast %8 : vector<1x32xf32> to vector<16x32xf32>
    %10 = arith.addf %7, %9 : vector<16x32xf32>
    %c0_10 = arith.constant 0 : index
    %c0_11 = arith.constant 0 : index
    %11 = vector.load %arg6[%c0_10, %c0_11] : memref<32x32xbf16, #tpu.memory_space<vmem>>, vector<32x32xbf16>
    %cst_12 = arith.constant dense<0.000000e+00> : vector<16x32xf32>
    %12 = tpu.matmul %0, %11, %cst_12 {dimension_numbers = #tpu.dot_dimension_numbers<[1], [0], [0], [1], [0, 0, 1, 1], [], []>} : vector<16x32xbf16>, vector<32x32xbf16>, vector<16x32xf32> -> vector<16x32xf32>
    %c0_13 = arith.constant 0 : index
    %c0_14 = arith.constant 0 : index
    %13 = vector.load %arg7[%c0_13, %c0_14] : memref<1x32xf32, #tpu.memory_space<vmem>>, vector<1x32xf32>
    %14 = vector.broadcast %13 : vector<1x32xf32> to vector<16x32xf32>
    %15 = arith.addf %12, %14 : vector<16x32xf32>
    %c1_i32 = arith.constant 1 : i32
    %16 = tpu.dynamic_rotate %10 by %c1_i32 dim 0 : vector<16x32xf32>, i32 -> vector<16x32xf32>
    %c15_i32 = arith.constant 15 : i32
    %17 = tpu.dynamic_rotate %10 by %c15_i32 dim 0 : vector<16x32xf32>, i32 -> vector<16x32xf32>
    %c1_i32_15 = arith.constant 1 : i32
    %18 = tpu.dynamic_rotate %15 by %c1_i32_15 dim 0 : vector<16x32xf32>, i32 -> vector<16x32xf32>
    %c15_i32_16 = arith.constant 15 : i32
    %19 = tpu.dynamic_rotate %15 by %c15_i32_16 dim 0 : vector<16x32xf32>, i32 -> vector<16x32xf32>
    %20 = arith.mulf %5, %16 : vector<16x32xf32>
    %cst_17 = arith.constant dense<0.000000e+00> : vector<16xf32>
    %21 = vector.multi_reduction <add>, %20, %cst_17 [1] : vector<16x32xf32> to vector<16xf32>
    %22 = vector.shape_cast %21 : vector<16xf32> to vector<16x1xf32>
    %23 = arith.mulf %5, %10 : vector<16x32xf32>
    %cst_18 = arith.constant dense<0.000000e+00> : vector<16xf32>
    %24 = vector.multi_reduction <add>, %23, %cst_18 [1] : vector<16x32xf32> to vector<16xf32>
    %25 = vector.shape_cast %24 : vector<16xf32> to vector<16x1xf32>
    %26 = arith.mulf %5, %17 : vector<16x32xf32>
    %cst_19 = arith.constant dense<0.000000e+00> : vector<16xf32>
    %27 = vector.multi_reduction <add>, %26, %cst_19 [1] : vector<16x32xf32> to vector<16xf32>
    %28 = vector.shape_cast %27 : vector<16xf32> to vector<16x1xf32>
    %29 = tpu.iota {dimensions = array<i32: 0>} : vector<16x1xi32>
    %c8_i32 = arith.constant 8 : i32
    %c0_i32 = arith.constant 0 : i32
    %30 = arith.cmpi eq, %c8_i32, %c0_i32 : i32
    %c1_i32_20 = arith.constant 1 : i32
    %31 = arith.select %30, %c1_i32_20, %c8_i32 : i32
    %32 = vector.broadcast %31 : i32 to vector<16x1xi32>
    %33 = arith.remsi %29, %32 : vector<16x1xi32>
    %c0_i32_21 = arith.constant 0 : i32
    %34 = vector.broadcast %c0_i32_21 : i32 to vector<16x1xi32>
    %35 = arith.cmpi ne, %33, %34 : vector<16x1xi32>
    %c0_i32_22 = arith.constant 0 : i32
    %36 = vector.broadcast %c0_i32_22 : i32 to vector<16x1xi32>
    %37 = arith.cmpi slt, %33, %36 : vector<16x1xi32>
    %c0_i32_23 = arith.constant 0 : i32
    %38 = arith.cmpi slt, %31, %c0_i32_23 : i32
    %39 = vector.broadcast %38 : i1 to vector<16x1xi1>
    %40 = vector.broadcast %39 : vector<16x1xi1> to vector<16x1xi1>
    %41 = arith.xori %37, %40 : vector<16x1xi1>
    %42 = arith.andi %41, %35 : vector<16x1xi1>
    %43 = vector.broadcast %31 : i32 to vector<16x1xi32>
    %44 = arith.addi %33, %43 : vector<16x1xi32>
    %45 = arith.select %42, %44, %33 : vector<16x1xi1>, vector<16x1xi32>
    %c0_i32_24 = arith.constant 0 : i32
    %46 = vector.broadcast %c0_i32_24 : i32 to vector<16x1xi32>
    %47 = arith.cmpi eq, %45, %46 : vector<16x1xi32>
    %cst_25 = arith.constant 0xFF800000 : f32
    %48 = vector.broadcast %cst_25 : f32 to vector<16x1xf32>
    %49 = arith.select %47, %48, %22 : vector<16x1xi1>, vector<16x1xf32>
    %c7_i32 = arith.constant 7 : i32
    %50 = vector.broadcast %c7_i32 : i32 to vector<16x1xi32>
    %51 = arith.cmpi eq, %45, %50 : vector<16x1xi32>
    %cst_26 = arith.constant 0xFF800000 : f32
    %52 = vector.broadcast %cst_26 : f32 to vector<16x1xf32>
    %53 = arith.select %51, %52, %28 : vector<16x1xi1>, vector<16x1xf32>
    %54 = arith.maximumf %49, %53 : vector<16x1xf32>
    %55 = arith.maximumf %54, %25 : vector<16x1xf32>
    %56 = arith.subf %49, %55 : vector<16x1xf32>
    %57 = math.exp %56 : vector<16x1xf32>
    %58 = arith.subf %25, %55 : vector<16x1xf32>
    %59 = math.exp %58 : vector<16x1xf32>
    %60 = arith.subf %53, %55 : vector<16x1xf32>
    %61 = math.exp %60 : vector<16x1xf32>
    %62 = arith.addf %57, %59 : vector<16x1xf32>
    %63 = arith.addf %62, %61 : vector<16x1xf32>
    %64 = tpu.reciprocal %63 {approx = true} : vector<16x1xf32> -> vector<16x1xf32>
    %65 = arith.mulf %57, %64 : vector<16x1xf32>
    %66 = vector.broadcast %65 : vector<16x1xf32> to vector<16x32xf32>
    %67 = arith.mulf %66, %18 : vector<16x32xf32>
    %68 = arith.mulf %59, %64 : vector<16x1xf32>
    %69 = vector.broadcast %68 : vector<16x1xf32> to vector<16x32xf32>
    %70 = arith.mulf %69, %15 : vector<16x32xf32>
    %71 = arith.addf %67, %70 : vector<16x32xf32>
    %72 = arith.mulf %61, %64 : vector<16x1xf32>
    %73 = vector.broadcast %72 : vector<16x1xf32> to vector<16x32xf32>
    %74 = arith.mulf %73, %19 : vector<16x32xf32>
    %75 = arith.addf %71, %74 : vector<16x32xf32>
    %76 = arith.truncf %75 : vector<16x32xf32> to vector<16x32xbf16>
    %c0_27 = arith.constant 0 : index
    %c0_28 = arith.constant 0 : index
    %77 = vector.load %arg8[%c0_27, %c0_28] : memref<32x128xbf16, #tpu.memory_space<vmem>>, vector<32x128xbf16>
    %cst_29 = arith.constant dense<0.000000e+00> : vector<16x128xf32>
    %78 = tpu.matmul %76, %77, %cst_29 {dimension_numbers = #tpu.dot_dimension_numbers<[1], [0], [0], [1], [0, 0, 1, 1], [], []>} : vector<16x32xbf16>, vector<32x128xbf16>, vector<16x128xf32> -> vector<16x128xf32>
    %c0_30 = arith.constant 0 : index
    %c0_31 = arith.constant 0 : index
    %79 = vector.load %arg9[%c0_30, %c0_31] : memref<32x128xbf16, #tpu.memory_space<vmem>>, vector<32x128xbf16>
    %cst_32 = arith.constant dense<0.000000e+00> : vector<16x128xf32>
    %80 = tpu.matmul %0, %79, %cst_32 {dimension_numbers = #tpu.dot_dimension_numbers<[1], [0], [0], [1], [0, 0, 1, 1], [], []>} : vector<16x32xbf16>, vector<32x128xbf16>, vector<16x128xf32> -> vector<16x128xf32>
    %81 = arith.addf %78, %80 : vector<16x128xf32>
    %c0_33 = arith.constant 0 : index
    %c0_34 = arith.constant 0 : index
    %82 = vector.load %arg10[%c0_33, %c0_34] : memref<1x128xf32, #tpu.memory_space<vmem>>, vector<1x128xf32>
    %83 = vector.broadcast %82 : vector<1x128xf32> to vector<16x128xf32>
    %84 = arith.addf %81, %83 : vector<16x128xf32>
    %cst_35 = arith.constant dense<0.000000e+00> : vector<16xf32>
    %85 = vector.multi_reduction <add>, %84, %cst_35 [1] : vector<16x128xf32> to vector<16xf32>
    %86 = vector.shape_cast %85 : vector<16xf32> to vector<16x1xf32>
    %cst_36 = arith.constant 0.0833333358 : f32
    %87 = vector.broadcast %cst_36 : f32 to vector<16x1xf32>
    %88 = arith.mulf %86, %87 : vector<16x1xf32>
    %89 = arith.mulf %84, %84 : vector<16x128xf32>
    %cst_37 = arith.constant dense<0.000000e+00> : vector<16xf32>
    %90 = vector.multi_reduction <add>, %89, %cst_37 [1] : vector<16x128xf32> to vector<16xf32>
    %91 = vector.shape_cast %90 : vector<16xf32> to vector<16x1xf32>
    %cst_38 = arith.constant 0.0833333358 : f32
    %92 = vector.broadcast %cst_38 : f32 to vector<16x1xf32>
    %93 = arith.mulf %91, %92 : vector<16x1xf32>
    %94 = arith.mulf %88, %88 : vector<16x1xf32>
    %95 = arith.subf %93, %94 : vector<16x1xf32>
    %96 = vector.broadcast %88 : vector<16x1xf32> to vector<16x128xf32>
    %97 = arith.subf %84, %96 : vector<16x128xf32>
    %cst_39 = arith.constant 9.99999997E-7 : f32
    %98 = vector.broadcast %cst_39 : f32 to vector<16x1xf32>
    %99 = arith.addf %95, %98 : vector<16x1xf32>
    %100 = math.rsqrt %99 : vector<16x1xf32>
    %101 = vector.broadcast %100 : vector<16x1xf32> to vector<16x128xf32>
    %102 = arith.mulf %97, %101 : vector<16x128xf32>
    %c0_40 = arith.constant 0 : index
    %c0_41 = arith.constant 0 : index
    %103 = vector.load %arg11[%c0_40, %c0_41] : memref<1x128xf32, #tpu.memory_space<vmem>>, vector<1x128xf32>
    %104 = vector.broadcast %103 : vector<1x128xf32> to vector<16x128xf32>
    %105 = arith.mulf %102, %104 : vector<16x128xf32>
    %c0_42 = arith.constant 0 : index
    %c0_43 = arith.constant 0 : index
    %106 = vector.load %arg12[%c0_42, %c0_43] : memref<1x128xf32, #tpu.memory_space<vmem>>, vector<1x128xf32>
    %107 = vector.broadcast %106 : vector<1x128xf32> to vector<16x128xf32>
    %108 = arith.addf %105, %107 : vector<16x128xf32>
    %109 = arith.negf %108 : vector<16x128xf32>
    %110 = math.exp %109 : vector<16x128xf32>
    %cst_44 = arith.constant 1.000000e+00 : f32
    %111 = vector.broadcast %cst_44 : f32 to vector<16x128xf32>
    %112 = arith.addf %111, %110 : vector<16x128xf32>
    %113 = arith.divf %111, %112 : vector<16x128xf32>
    %c0_45 = arith.constant 0 : index
    %c0_46 = arith.constant 0 : index
    %114 = vector.load %arg13[%c0_45, %c0_46] : memref<16x128xf32, #tpu.memory_space<vmem>>, vector<16x128xf32>
    tpu.vector_store %arg13[%c0_45, %c0_46], %113 {strides = array<i32>} : memref<16x128xf32, #tpu.memory_space<vmem>>, vector<16x128xf32>,
    return
  }
  func.func @transform_0(%arg0: i32) -> (i32, i32) {
    %c0_i32 = arith.constant 0 : i32
    %c0_i32_0 = arith.constant 0 : i32
    return %arg0, %c0_i32 : i32, i32
  }
  func.func @transform_1(%arg0: i32) -> (i32, i32) {
    %c0_i32 = arith.constant 0 : i32
    %c0_i32_0 = arith.constant 0 : i32
    %c0_i32_1 = arith.constant 0 : i32
    return %c0_i32, %c0_i32_0 : i32, i32
  }
  func.func @transform_2(%arg0: i32) -> (i32, i32) {
    %c0_i32 = arith.constant 0 : i32
    %c0_i32_0 = arith.constant 0 : i32
    %c0_i32_1 = arith.constant 0 : i32
    return %c0_i32, %c0_i32_0 : i32, i32
  }
  func.func @transform_3(%arg0: i32) -> (i32, i32) {
    %c0_i32 = arith.constant 0 : i32
    %c0_i32_0 = arith.constant 0 : i32
    %c0_i32_1 = arith.constant 0 : i32
    return %c0_i32, %c0_i32_0 : i32, i32
  }
  func.func @transform_4(%arg0: i32) -> (i32, i32) {
    %c0_i32 = arith.constant 0 : i32
    %c0_i32_0 = arith.constant 0 : i32
    %c0_i32_1 = arith.constant 0 : i32
    return %c0_i32, %c0_i32_0 : i32, i32
  }
  func.func @transform_5(%arg0: i32) -> (i32, i32) {
    %c0_i32 = arith.constant 0 : i32
    %c0_i32_0 = arith.constant 0 : i32
    %c0_i32_1 = arith.constant 0 : i32
    return %c0_i32, %c0_i32_0 : i32, i32
  }
  func.func @transform_6(%arg0: i32) -> (i32, i32) {
    %c0_i32 = arith.constant 0 : i32
    %c0_i32_0 = arith.constant 0 : i32
    %c0_i32_1 = arith.constant 0 : i32
    return %c0_i32, %c0_i32_0 : i32, i32
  }
  func.func @transform_7(%arg0: i32) -> (i32, i32) {
    %c0_i32 = arith.constant 0 : i32
    %c0_i32_0 = arith.constant 0 : i32
    %c0_i32_1 = arith.constant 0 : i32
    return %c0_i32, %c0_i32_0 : i32, i32
  }
  func.func @transform_8(%arg0: i32) -> (i32, i32) {
    %c0_i32 = arith.constant 0 : i32
    %c0_i32_0 = arith.constant 0 : i32
    %c0_i32_1 = arith.constant 0 : i32
    return %c0_i32, %c0_i32_0 : i32, i32
  }
  func.func @transform_9(%arg0: i32) -> (i32, i32) {
    %c0_i32 = arith.constant 0 : i32
    %c0_i32_0 = arith.constant 0 : i32
    %c0_i32_1 = arith.constant 0 : i32
    return %c0_i32, %c0_i32_0 : i32, i32
  }
  func.func @transform_10(%arg0: i32) -> (i32, i32) {
    %c0_i32 = arith.constant 0 : i32
    %c0_i32_0 = arith.constant 0 : i32
    %c0_i32_1 = arith.constant 0 : i32
    return %c0_i32, %c0_i32_0 : i32, i32
  }
  func.func @transform_11(%arg0: i32) -> (i32, i32) {
    %c0_i32 = arith.constant 0 : i32
    %c0_i32_0 = arith.constant 0 : i32
    %c0_i32_1 = arith.constant 0 : i32
    return %c0_i32, %c0_i32_0 : i32, i32
  }
  func.func @transform_12(%arg0: i32) -> (i32, i32) {
    %c0_i32 = arith.constant 0 : i32
    %c0_i32_0 = arith.constant 0 : i32
    return %arg0, %c0_i32 : i32, i32
  }
}

</mosaic_0001>

<llo_original>
// kernel: tpu_custom_call.1
$region0: #{tpu_custom_call.1}
  #allocation0 [shape = 'u32[]', space=smem, size = 0x4, offset = 0x4, fixed_abs, tag = 'smem constant byte address 0x4 - core index']
  #allocation1 [shape = 'u32[144,128]{1,0:T(1,128)}', space=vmem, size = 0x12000, scoped, tag = 'internal scratch']
  %s0 = inlined_call_operand.hbm [shape: bf16[32,32], index: 0, kind: input, shape index: {}]
  %s1 = inlined_call_operand.hbm [shape: bf16[32,32], index: 1, kind: input, shape index: {}]
  %s2 = inlined_call_operand.vmem [shape: f32[1,32], index: 2, kind: input, shape index: {}]
  %s3 = inlined_call_operand.hbm [shape: bf16[32,32], index: 3, kind: input, shape index: {}]
  %s4 = inlined_call_operand.vmem [shape: f32[1,32], index: 4, kind: input, shape index: {}]
  %s5 = inlined_call_operand.vmem [shape: bf16[32,32], index: 5, kind: input, shape index: {}]
  %s6 = inlined_call_operand.vmem [shape: f32[1,32], index: 6, kind: input, shape index: {}]
  %s7 = inlined_call_operand.hbm [shape: bf16[32,128], index: 7, kind: input, shape index: {}]
  %s8 = inlined_call_operand.hbm [shape: bf16[32,128], index: 8, kind: input, shape index: {}]
  %s9 = inlined_call_operand.vmem [shape: f32[1,128], index: 9, kind: input, shape index: {}]
  %s10 = inlined_call_operand.vmem [shape: f32[1,128], index: 10, kind: input, shape index: {}]
  %s11 = inlined_call_operand.vmem [shape: f32[1,128], index: 11, kind: input, shape index: {}]
  %s12 = inlined_call_operand.hbm [shape: f32[32,128], index: 12, kind: output, shape index: {}]
  %s13 = sld [smem:[#allocation0]]
  $region101: #{tpu_custom_call.1} parent=0
    _
  %s15 = ssub.s32 1, %s13
  %s16 = scalar_select 0, %s15, %s13
  $region1: #{tpu_custom_call.1} parent=0
    #allocation2 [shape = 'u8[8192]{0}', space=vmem, size = 0x2000, scoped, tag = 'input window, operand 0']
    #allocation3 [shape = 's32[2]{0}', space=sflag, size = 0x8, scoped, tag = 'scoped memory for tpu_custom_call.1']
    #allocation4 [shape = 's32[2]{0}', space=sflag, size = 0x8, scoped, tag = 'scoped memory for tpu_custom_call.1']
    #allocation5 [shape = 'u8[8192]{0}', space=vmem, size = 0x2000, scoped, tag = 'input window, operand 1, single buffered']
    #allocation6 [shape = 's32[1]{0}', space=sflag, size = 0x4, scoped, tag = 'scoped memory for tpu_custom_call.1']
    #allocation7 [shape = 'u8[8192]{0}', space=vmem, size = 0x2000, scoped, tag = 'input window, operand 3, single buffered']
    #allocation8 [shape = 'u8[8192]{0}', space=vmem, size = 0x2000, scoped, tag = 'input window, operand 7, single buffered']
    #allocation9 [shape = 's32[1]{0}', space=sflag, size = 0x4, scoped, tag = 'scoped memory for tpu_custom_call.1']
    #allocation10 [shape = 'u8[8192]{0}', space=vmem, size = 0x2000, scoped, tag = 'input window, operand 8, single buffered']
    #allocation11 [shape = 'u8[16384]{0}', space=vmem, size = 0x4000, scoped, tag = 'output window, operand 0']
    %17 = vsyncpa [#allocation3], 0
    %s18 = scalar_lea.sflag [#allocation3], 1
    %19 = vsyncpa %s18, 0
    %20 = vsyncpa [#allocation6], 0
    %21 = vsyncpa [#allocation9], 0
    %22 = vsyncpa [#allocation4], 0
    %s23 = scalar_lea.sflag [#allocation4], 1
    %24 = vsyncpa %s23, 0
    loop: start=0, step=1, limit=4
    $region2: #{tpu_custom_call.1} parent=1 // loop_pre_header
      _
    $region3: #{tpu_custom_call.1} parent=1 // loop_header
      %s26 = sphi 0, %s30
      %p27 = scmp.ge.s32.totalorder %s26, 4
      %s36 = sphi 0, %s38
      %s39 = sphi 0, %s36
      %s40 = sphi 0, %s39
      %s56 = sphi 0, %s40
      %s60 = sphi 0, %s60
      %s62 = sphi 0, %s60
      %s63 = sphi 0, %s62
      %s77 = sphi 0, %s63
      %s81 = sphi 0, %s81
      %s83 = sphi 0, %s81
      %s84 = sphi 0, %s83
      %s98 = sphi 0, %s84
      %s102 = sphi 0, %s102
      %s104 = sphi 0, %s102
      %s105 = sphi 0, %s104
      %s119 = sphi 0, %s105
      %s123 = sphi 0, %s123
      %s125 = sphi 0, %s123
      %s126 = sphi 0, %s125
      %s140 = sphi 0, %s126
      %s144 = sphi 0, %s144
      %s146 = sphi 0, %s144
      %s147 = sphi 0, %s146
      %s161 = sphi 0, %s147
      %s165 = sphi 0, %s165
      %s167 = sphi 0, %s165
      %s168 = sphi 0, %s167
      %s182 = sphi 0, %s168
      %s186 = sphi 0, %s186
      %s188 = sphi 0, %s186
      %s189 = sphi 0, %s188
      %s203 = sphi 0, %s189
      %s207 = sphi 0, %s207
      %s209 = sphi 0, %s207
      %s210 = sphi 0, %s209
      %s224 = sphi 0, %s210
      %s228 = sphi 0, %s228
      %s230 = sphi 0, %s228
      %s231 = sphi 0, %s230
      %s245 = sphi 0, %s231
      %s249 = sphi 0, %s249
      %s251 = sphi 0, %s249
      %s252 = sphi 0, %s251
      %s266 = sphi 0, %s252
      %s270 = sphi 0, %s270
      %s272 = sphi 0, %s270
      %s273 = sphi 0, %s272
      %s287 = sphi 0, %s273
      %s293 = sphi 0, %s295
      %s296 = sphi 0, %s293
      %s297 = sphi 0, %s296
      %s313 = sphi 0, %s297
    $region4: #{tpu_custom_call.1} parent=1 // loop_header_branch
      %29 = sbr.rel (%p27) target = $region8
    $region5: #{tpu_custom_call.1} parent=1 // loop_body
      %s31 = ssub.s32 %s26, 1
      %s32 = ssub.s32 %s26, 2
      %s33 = sadd.s32 %s26, 1
      %s34 = ssub.s32 %s26, %s33
      %p35 = scmp.eq.s32.totalorder %s34, 0
      %s37 = sadd.s32 %s36, 1
      %s38 = scalar_select %p35, %s36, %s37
      %p41 = pneg %p35
      %p42 = scmp.eq.s32.totalorder %s26, 1
      %p43 = por %p41, %p42
      %p44 = scmp.ne.s32.totalorder %s36, %s39
      %p45 = scmp.eq.s32.totalorder %s26, 0
      %p46 = por %p44, %p45
      %p47 = scmp.ne.s32.totalorder %s36, %s39
      %p48 = scmp.eq.s32.totalorder %s31, 1
      %p49 = por %p47, %p48
      %p50 = scmp.ne.s32.totalorder %s39, %s40
      %p51 = scmp.eq.s32.totalorder %s31, 0
      %p52 = por %p50, %p51
      %p53 = scmp.ne.s32.totalorder %s39, %s40
      %p54 = scmp.eq.s32.totalorder %s32, 1
      %p55 = por %p53, %p54
      %p57 = scmp.ne.s32.totalorder %s40, %s56
      %p58 = scmp.eq.s32.totalorder %s32, 0
      %p59 = por %p57, %p58
      %s61 = sadd.s32 %s60, 1
      %p64 = scmp.eq.s32.totalorder %s26, 1
      %p65 = scmp.ne.s32.totalorder %s60, %s62
      %p66 = scmp.eq.s32.totalorder %s26, 0
      %p67 = por %p65, %p66
      %p68 = scmp.ne.s32.totalorder %s60, %s62
      %p69 = scmp.eq.s32.totalorder %s31, 1
      %p70 = por %p68, %p69
      %p71 = scmp.ne.s32.totalorder %s62, %s63
      %p72 = scmp.eq.s32.totalorder %s31, 0
      %p73 = por %p71, %p72
      %p74 = scmp.ne.s32.totalorder %s62, %s63
      %p75 = scmp.eq.s32.totalorder %s32, 1
      %p76 = por %p74, %p75
      %p78 = scmp.ne.s32.totalorder %s63, %s77
      %p79 = scmp.eq.s32.totalorder %s32, 0
      %p80 = por %p78, %p79
      %s82 = sadd.s32 %s81, 1
      %p85 = scmp.eq.s32.totalorder %s26, 1
      %p86 = scmp.ne.s32.totalorder %s81, %s83
      %p87 = scmp.eq.s32.totalorder %s26, 0
      %p88 = por %p86, %p87
      %p89 = scmp.ne.s32.totalorder %s81, %s83
      %p90 = scmp.eq.s32.totalorder %s31, 1
      %p91 = por %p89, %p90
      %p92 = scmp.ne.s32.totalorder %s83, %s84
      %p93 = scmp.eq.s32.totalorder %s31, 0
      %p94 = por %p92, %p93
      %p95 = scmp.ne.s32.totalorder %s83, %s84
      %p96 = scmp.eq.s32.totalorder %s32, 1
      %p97 = por %p95, %p96
      %p99 = scmp.ne.s32.totalorder %s84, %s98
      %p100 = scmp.eq.s32.totalorder %s32, 0
      %p101 = por %p99, %p100
      %s103 = sadd.s32 %s102, 1
      %p106 = scmp.eq.s32.totalorder %s26, 1
      %p107 = scmp.ne.s32.totalorder %s102, %s104
      %p108 = scmp.eq.s32.totalorder %s26, 0
      %p109 = por %p107, %p108
      %p110 = scmp.ne.s32.totalorder %s102, %s104
      %p111 = scmp.eq.s32.totalorder %s31, 1
      %p112 = por %p110, %p111
      %p113 = scmp.ne.s32.totalorder %s104, %s105
      %p114 = scmp.eq.s32.totalorder %s31, 0
      %p115 = por %p113, %p114
      %p116 = scmp.ne.s32.totalorder %s104, %s105
      %p117 = scmp.eq.s32.totalorder %s32, 1
      %p118 = por %p116, %p117
      %p120 = scmp.ne.s32.totalorder %s105, %s119
      %p121 = scmp.eq.s32.totalorder %s32, 0
      %p122 = por %p120, %p121
      %s124 = sadd.s32 %s123, 1
      %p127 = scmp.eq.s32.totalorder %s26, 1
      %p128 = scmp.ne.s32.totalorder %s123, %s125
      %p129 = scmp.eq.s32.totalorder %s26, 0
      %p130 = por %p128, %p129
      %p131 = scmp.ne.s32.totalorder %s123, %s125
      %p132 = scmp.eq.s32.totalorder %s31, 1
      %p133 = por %p131, %p132
      %p134 = scmp.ne.s32.totalorder %s125, %s126
      %p135 = scmp.eq.s32.totalorder %s31, 0
      %p136 = por %p134, %p135
      %p137 = scmp.ne.s32.totalorder %s125, %s126
      %p138 = scmp.eq.s32.totalorder %s32, 1
      %p139 = por %p137, %p138
      %p141 = scmp.ne.s32.totalorder %s126, %s140
      %p142 = scmp.eq.s32.totalorder %s32, 0
      %p143 = por %p141, %p142
      %s145 = sadd.s32 %s144, 1
      %p148 = scmp.eq.s32.totalorder %s26, 1
      %p149 = scmp.ne.s32.totalorder %s144, %s146
      %p150 = scmp.eq.s32.totalorder %s26, 0
      %p151 = por %p149, %p150
      %p152 = scmp.ne.s32.totalorder %s144, %s146
      %p153 = scmp.eq.s32.totalorder %s31, 1
      %p154 = por %p152, %p153
      %p155 = scmp.ne.s32.totalorder %s146, %s147
      %p156 = scmp.eq.s32.totalorder %s31, 0
      %p157 = por %p155, %p156
      %p158 = scmp.ne.s32.totalorder %s146, %s147
      %p159 = scmp.eq.s32.totalorder %s32, 1
      %p160 = por %p158, %p159
      %p162 = scmp.ne.s32.totalorder %s147, %s161
      %p163 = scmp.eq.s32.totalorder %s32, 0
      %p164 = por %p162, %p163
      %s166 = sadd.s32 %s165, 1
      %p169 = scmp.eq.s32.totalorder %s26, 1
      %p170 = scmp.ne.s32.totalorder %s165, %s167
      %p171 = scmp.eq.s32.totalorder %s26, 0
      %p172 = por %p170, %p171
      %p173 = scmp.ne.s32.totalorder %s165, %s167
      %p174 = scmp.eq.s32.totalorder %s31, 1
      %p175 = por %p173, %p174
      %p176 = scmp.ne.s32.totalorder %s167, %s168
      %p177 = scmp.eq.s32.totalorder %s31, 0
      %p178 = por %p176, %p177
      %p179 = scmp.ne.s32.totalorder %s167, %s168
      %p180 = scmp.eq.s32.totalorder %s32, 1
      %p181 = por %p179, %p180
      %p183 = scmp.ne.s32.totalorder %s168, %s182
      %p184 = scmp.eq.s32.totalorder %s32, 0
      %p185 = por %p183, %p184
      %s187 = sadd.s32 %s186, 1
      %p190 = scmp.eq.s32.totalorder %s26, 1
      %p191 = scmp.ne.s32.totalorder %s186, %s188
      %p192 = scmp.eq.s32.totalorder %s26, 0
      %p193 = por %p191, %p192
      %p194 = scmp.ne.s32.totalorder %s186, %s188
      %p195 = scmp.eq.s32.totalorder %s31, 1
      %p196 = por %p194, %p195
      %p197 = scmp.ne.s32.totalorder %s188, %s189
      %p198 = scmp.eq.s32.totalorder %s31, 0
      %p199 = por %p197, %p198
      %p200 = scmp.ne.s32.totalorder %s188, %s189
      %p201 = scmp.eq.s32.totalorder %s32, 1
      %p202 = por %p200, %p201
      %p204 = scmp.ne.s32.totalorder %s189, %s203
      %p205 = scmp.eq.s32.totalorder %s32, 0
      %p206 = por %p204, %p205
      %s208 = sadd.s32 %s207, 1
      %p211 = scmp.eq.s32.totalorder %s26, 1
      %p212 = scmp.ne.s32.totalorder %s207, %s209
      %p213 = scmp.eq.s32.totalorder %s26, 0
      %p214 = por %p212, %p213
      %p215 = scmp.ne.s32.totalorder %s207, %s209
      %p216 = scmp.eq.s32.totalorder %s31, 1
      %p217 = por %p215, %p216
      %p218 = scmp.ne.s32.totalorder %s209, %s210
      %p219 = scmp.eq.s32.totalorder %s31, 0
      %p220 = por %p218, %p219
      %p221 = scmp.ne.s32.totalorder %s209, %s210
      %p222 = scmp.eq.s32.totalorder %s32, 1
      %p223 = por %p221, %p222
      %p225 = scmp.ne.s32.totalorder %s210, %s224
      %p226 = scmp.eq.s32.totalorder %s32, 0
      %p227 = por %p225, %p226
      %s229 = sadd.s32 %s228, 1
      %p232 = scmp.eq.s32.totalorder %s26, 1
      %p233 = scmp.ne.s32.totalorder %s228, %s230
      %p234 = scmp.eq.s32.totalorder %s26, 0
      %p235 = por %p233, %p234
      %p236 = scmp.ne.s32.totalorder %s228, %s230
      %p237 = scmp.eq.s32.totalorder %s31, 1
      %p238 = por %p236, %p237
      %p239 = scmp.ne.s32.totalorder %s230, %s231
      %p240 = scmp.eq.s32.totalorder %s31, 0
      %p241 = por %p239, %p240
      %p242 = scmp.ne.s32.totalorder %s230, %s231
      %p243 = scmp.eq.s32.totalorder %s32, 1
      %p244 = por %p242, %p243
      %p246 = scmp.ne.s32.totalorder %s231, %s245
      %p247 = scmp.eq.s32.totalorder %s32, 0
      %p248 = por %p246, %p247
      %s250 = sadd.s32 %s249, 1
      %p253 = scmp.eq.s32.totalorder %s26, 1
      %p254 = scmp.ne.s32.totalorder %s249, %s251
      %p255 = scmp.eq.s32.totalorder %s26, 0
      %p256 = por %p254, %p255
      %p257 = scmp.ne.s32.totalorder %s249, %s251
      %p258 = scmp.eq.s32.totalorder %s31, 1
      %p259 = por %p257, %p258
      %p260 = scmp.ne.s32.totalorder %s251, %s252
      %p261 = scmp.eq.s32.totalorder %s31, 0
      %p262 = por %p260, %p261
      %p263 = scmp.ne.s32.totalorder %s251, %s252
      %p264 = scmp.eq.s32.totalorder %s32, 1
      %p265 = por %p263, %p264
      %p267 = scmp.ne.s32.totalorder %s252, %s266
      %p268 = scmp.eq.s32.totalorder %s32, 0
      %p269 = por %p267, %p268
      %s271 = sadd.s32 %s270, 1
      %p274 = scmp.eq.s32.totalorder %s26, 1
      %p275 = scmp.ne.s32.totalorder %s270, %s272
      %p276 = scmp.eq.s32.totalorder %s26, 0
      %p277 = por %p275, %p276
      %p278 = scmp.ne.s32.totalorder %s270, %s272
      %p279 = scmp.eq.s32.totalorder %s31, 1
      %p280 = por %p278, %p279
      %p281 = scmp.ne.s32.totalorder %s272, %s273
      %p282 = scmp.eq.s32.totalorder %s31, 0
      %p283 = por %p281, %p282
      %p284 = scmp.ne.s32.totalorder %s272, %s273
      %p285 = scmp.eq.s32.totalorder %s32, 1
      %p286 = por %p284, %p285
      %p288 = scmp.ne.s32.totalorder %s273, %s287
      %p289 = scmp.eq.s32.totalorder %s32, 0
      %p290 = por %p288, %p289
      %s291 = ssub.s32 %s26, %s33
      %p292 = scmp.eq.s32.totalorder %s291, 0
      %s294 = sadd.s32 %s293, 1
      %s295 = scalar_select %p292, %s293, %s294
      %p298 = pneg %p292
      %p299 = scmp.eq.s32.totalorder %s26, 1
      %p300 = por %p298, %p299
      %p301 = scmp.ne.s32.totalorder %s293, %s296
      %p302 = scmp.eq.s32.totalorder %s26, 0
      %p303 = por %p301, %p302
      %p304 = scmp.ne.s32.totalorder %s293, %s296
      %p305 = scmp.eq.s32.totalorder %s31, 1
      %p306 = por %p304, %p305
      %p307 = scmp.ne.s32.totalorder %s296, %s297
      %p308 = scmp.eq.s32.totalorder %s31, 0
      %p309 = por %p307, %p308
      %p310 = scmp.ne.s32.totalorder %s296, %s297
      %p311 = scmp.eq.s32.totalorder %s32, 1
      %p312 = por %p310, %p311
      %p314 = scmp.ne.s32.totalorder %s297, %s313
      %p315 = scmp.eq.s32.totalorder %s32, 0
      %p316 = por %p314, %p315
      %p317 = scmp.le.s32.totalorder 1, %s26
      %p318 = scmp.lt.s32.totalorder %s26, 3
      %p319 = pnand %p317, %p318
      %p320 = pneg %p319
      // Predicated region
      $region9: #{tpu_custom_call.1} parent=5 // pred_check
        _
      $region10: #{tpu_custom_call.1} parent=5 // pred_check_branch
        %322 = sbr.rel (%p319) target = $region12
      $region11: #{tpu_custom_call.1} parent=5 // pred_region
        %s323 = ssub.s32 %s26, 1
        // Predicated region
        $region13: #{tpu_custom_call.1} parent=11 // pred_check
          %p324 = pneg %p73
        $region14: #{tpu_custom_call.1} parent=11 // pred_check_branch
          %326 = sbr.rel (%p324) target = $region16
        $region15: #{tpu_custom_call.1} parent=11 // pred_region
          %s328 = ssub.s32 256, 256
          %329 = vsyncadd [#allocation6], %s328
          %s330 = sshll.u32 [#allocation5], 4
          %s331 = int_to_ptr.vmem [resolvable:$true] %s330
          %336 = dma.hbm_to_vmem [thread:$0]  %s1, 256, %s331, [#allocation6], 64, 64, 4
        $region16: #{tpu_custom_call.1} parent=11 // pred_fallthru
          _
        // Predicated region
        $region17: #{tpu_custom_call.1} parent=11 // pred_check
          %p337 = pneg %p94
        $region18: #{tpu_custom_call.1} parent=11 // pred_check_branch
          %339 = sbr.rel (%p337) target = $region20
        $region19: #{tpu_custom_call.1} parent=11 // pred_region
          _
        $region20: #{tpu_custom_call.1} parent=11 // pred_fallthru
          _
        // Predicated region
        $region21: #{tpu_custom_call.1} parent=11 // pred_check
          %p340 = pneg %p115
        $region22: #{tpu_custom_call.1} parent=11 // pred_check_branch
          %342 = sbr.rel (%p340) target = $region24
        $region23: #{tpu_custom_call.1} parent=11 // pred_region
          %s344 = ssub.s32 256, 256
          %345 = vsyncadd [#allocation6], %s344
          %s346 = sshll.u32 [#allocation7], 4
          %s347 = int_to_ptr.vmem [resolvable:$true] %s346
          %352 = dma.hbm_to_vmem [thread:$0]  %s3, 256, %s347, [#allocation6], 64, 64, 4
        $region24: #{tpu_custom_call.1} parent=11 // pred_fallthru
          _
        // Predicated region
        $region25: #{tpu_custom_call.1} parent=11 // pred_check
          %p353 = pneg %p136
        $region26: #{tpu_custom_call.1} parent=11 // pred_check_branch
          %355 = sbr.rel (%p353) target = $region28
        $region27: #{tpu_custom_call.1} parent=11 // pred_region
          _
        $region28: #{tpu_custom_call.1} parent=11 // pred_fallthru
          _
        // Predicated region
        $region29: #{tpu_custom_call.1} parent=11 // pred_check
          %p356 = pneg %p157
        $region30: #{tpu_custom_call.1} parent=11 // pred_check_branch
          %358 = sbr.rel (%p356) target = $region32
        $region31: #{tpu_custom_call.1} parent=11 // pred_region
          _
        $region32: #{tpu_custom_call.1} parent=11 // pred_fallthru
          _
        // Predicated region
        $region33: #{tpu_custom_call.1} parent=11 // pred_check
          %p359 = pneg %p178
        $region34: #{tpu_custom_call.1} parent=11 // pred_check_branch
          %361 = sbr.rel (%p359) target = $region36
        $region35: #{tpu_custom_call.1} parent=11 // pred_region
          _
        $region36: #{tpu_custom_call.1} parent=11 // pred_fallthru
          _
        // Predicated region
        $region37: #{tpu_custom_call.1} parent=11 // pred_check
          %p362 = pneg %p199
        $region38: #{tpu_custom_call.1} parent=11 // pred_check_branch
          %364 = sbr.rel (%p362) target = $region40
        $region39: #{tpu_custom_call.1} parent=11 // pred_region
          %s366 = ssub.s32 256, 256
          %367 = vsyncadd [#allocation9], %s366
          %s368 = sshll.u32 [#allocation8], 4
          %s369 = int_to_ptr.vmem [resolvable:$true] %s368
          %374 = dma.hbm_to_vmem [thread:$0]  %s7, 256, %s369, [#allocation9], 64, 64, 4
        $region40: #{tpu_custom_call.1} parent=11 // pred_fallthru
          _
        // Predicated region
        $region41: #{tpu_custom_call.1} parent=11 // pred_check
          %p375 = pneg %p220
        $region42: #{tpu_custom_call.1} parent=11 // pred_check_branch
          %377 = sbr.rel (%p375) target = $region44
        $region43: #{tpu_custom_call.1} parent=11 // pred_region
          %s379 = ssub.s32 256, 256
          %380 = vsyncadd [#allocation9], %s379
          %s381 = sshll.u32 [#allocation10], 4
          %s382 = int_to_ptr.vmem [resolvable:$true] %s381
          %387 = dma.hbm_to_vmem [thread:$0]  %s8, 256, %s382, [#allocation9], 64, 64, 4
        $region44: #{tpu_custom_call.1} parent=11 // pred_fallthru
          _
        // Predicated region
        $region45: #{tpu_custom_call.1} parent=11 // pred_check
          %p388 = pneg %p241
        $region46: #{tpu_custom_call.1} parent=11 // pred_check_branch
          %390 = sbr.rel (%p388) target = $region48
        $region47: #{tpu_custom_call.1} parent=11 // pred_region
          _
        $region48: #{tpu_custom_call.1} parent=11 // pred_fallthru
          _
        // Predicated region
        $region49: #{tpu_custom_call.1} parent=11 // pred_check
          %p391 = pneg %p262
        $region50: #{tpu_custom_call.1} parent=11 // pred_check_branch
          %393 = sbr.rel (%p391) target = $region52
        $region51: #{tpu_custom_call.1} parent=11 // pred_region
          _
        $region52: #{tpu_custom_call.1} parent=11 // pred_fallthru
          _
        // Predicated region
        $region53: #{tpu_custom_call.1} parent=11 // pred_check
          %p394 = pneg %p283
        $region54: #{tpu_custom_call.1} parent=11 // pred_check_branch
          %396 = sbr.rel (%p394) target = $region56
        $region55: #{tpu_custom_call.1} parent=11 // pred_region
          _
        $region56: #{tpu_custom_call.1} parent=11 // pred_fallthru
          _
      $region12: #{tpu_custom_call.1} parent=5 // pred_fallthru
        _
      %p397 = scmp.lt.s32.totalorder %s26, 2
      // Predicated region
      $region57: #{tpu_custom_call.1} parent=5 // pred_check
        %p398 = pneg %p397
      $region58: #{tpu_custom_call.1} parent=5 // pred_check_branch
        %400 = sbr.rel (%p398) target = $region60
      $region59: #{tpu_custom_call.1} parent=5 // pred_region
        // Predicated region
        $region61: #{tpu_custom_call.1} parent=59 // pred_check
          %p401 = pneg %p46
        $region62: #{tpu_custom_call.1} parent=59 // pred_check_branch
          %403 = sbr.rel (%p401) target = $region64
        $region63: #{tpu_custom_call.1} parent=59 // pred_region
          %s404 = sand.u32 %s36, 1
          %s405 = scalar_lea.sflag [#allocation3], %s404
          %s406 = sand.u32 %s36, 1
          %s407 = smul.addr %s406, 8
          %s408 = scalar_lea.vmem [#allocation2], %s407
          %s409 = smul.u32 2, %s26
          %s411 = ssub.s32 128, 128
          %412 = vsyncadd %s405, %s411
          %s413 = smul.addr %s409, 64
          %s414 = scalar_lea.hbm %s0, %s413
          %s415 = sshll.u32 %s408, 4
          %s416 = int_to_ptr.vmem [resolvable:$true] %s415
          %421 = dma.hbm_to_vmem [thread:$0]  %s414, 128, %s416, %s405, 64, 64, 4
        $region64: #{tpu_custom_call.1} parent=59 // pred_fallthru
          _
      $region60: #{tpu_custom_call.1} parent=5 // pred_fallthru
        _
      %p422 = scmp.le.s32.totalorder 1, %s26
      %p423 = scmp.lt.s32.totalorder %s26, 3
      %p424 = pnand %p422, %p423
      %p425 = pneg %p424
      // Predicated region
      $region65: #{tpu_custom_call.1} parent=5 // pred_check
        _
      $region66: #{tpu_custom_call.1} parent=5 // pred_check_branch
        %427 = sbr.rel (%p424) target = $region68
      $region67: #{tpu_custom_call.1} parent=5 // pred_region
        %s428 = ssub.s32 %s26, 1
        %s429 = sand.u32 %s39, 1
        %s430 = scalar_lea.sflag [#allocation3], %s429
        %s431 = sand.u32 %s39, 1
        %s432 = smul.addr %s431, 8
        %s433 = scalar_lea.vmem [#allocation2], %s432
        // Predicated region
        $region69: #{tpu_custom_call.1} parent=67 // pred_check
          %p434 = pneg %p52
        $region70: #{tpu_custom_call.1} parent=67 // pred_check_branch
          %436 = sbr.rel (%p434) target = $region72
        $region71: #{tpu_custom_call.1} parent=67 // pred_region
          %437 = dma.done %s430, 128
        $region72: #{tpu_custom_call.1} parent=67 // pred_fallthru
          _
        // Predicated region
        $region73: #{tpu_custom_call.1} parent=67 // pred_check
          %p438 = pneg %p73
        $region74: #{tpu_custom_call.1} parent=67 // pred_check_branch
          %440 = sbr.rel (%p438) target = $region76
        $region75: #{tpu_custom_call.1} parent=67 // pred_region
          %441 = dma.done [#allocation6], 256
        $region76: #{tpu_custom_call.1} parent=67 // pred_fallthru
          _
        // Predicated region
        $region77: #{tpu_custom_call.1} parent=67 // pred_check
          %p442 = pneg %p115
        $region78: #{tpu_custom_call.1} parent=67 // pred_check_branch
          %444 = sbr.rel (%p442) target = $region80
        $region79: #{tpu_custom_call.1} parent=67 // pred_region
          %445 = dma.done [#allocation6], 256
        $region80: #{tpu_custom_call.1} parent=67 // pred_fallthru
          _
        // Predicated region
        $region81: #{tpu_custom_call.1} parent=67 // pred_check
          %p446 = pneg %p199
        $region82: #{tpu_custom_call.1} parent=67 // pred_check_branch
          %448 = sbr.rel (%p446) target = $region84
        $region83: #{tpu_custom_call.1} parent=67 // pred_region
          %449 = dma.done [#allocation9], 256
        $region84: #{tpu_custom_call.1} parent=67 // pred_fallthru
          _
        // Predicated region
        $region85: #{tpu_custom_call.1} parent=67 // pred_check
          %p450 = pneg %p220
        $region86: #{tpu_custom_call.1} parent=67 // pred_check_branch
          %452 = sbr.rel (%p450) target = $region88
        $region87: #{tpu_custom_call.1} parent=67 // pred_region
          %453 = dma.done [#allocation9], 256
        $region88: #{tpu_custom_call.1} parent=67 // pred_fallthru
          _
        %s454 = sand.u32 %s39, 1
        %s455 = scalar_lea.sflag [#allocation3], %s454
        %s456 = sand.u32 %s39, 1
        %s457 = smul.addr %s456, 8
        %s458 = scalar_lea.vmem [#allocation2], %s457
        %p459 = pneg %p52
        %p460 = pneg %p49
        %p461 = pneg %p73
        %p462 = pneg %p70
        %p463 = pneg %p94
        %p464 = pneg %p91
        %p465 = pneg %p115
        %p466 = pneg %p112
        %p467 = pneg %p136
        %p468 = pneg %p133
        %p469 = pneg %p157
        %p470 = pneg %p154
        %p471 = pneg %p178
        %p472 = pneg %p175
        %p473 = pneg %p199
        %p474 = pneg %p196
        %p475 = pneg %p220
        %p476 = pneg %p217
        %p477 = pneg %p241
        %p478 = pneg %p238
        %p479 = pneg %p262
        %p480 = pneg %p259
        %p481 = pneg %p283
        %p482 = pneg %p280
        %p483 = pneg %p309
        %p484 = pneg %p306
        %s485 = sand.u32 %s296, 1
        %s486 = scalar_lea.sflag [#allocation4], %s485
        %s487 = sand.u32 %s296, 1
        %s488 = smul.addr %s487, 16
        %s489 = scalar_lea.vmem [#allocation11], %s488
        %s490 = smul.u32 2, %s31
        %s491 = smul.u32 2, %s31
        %v493 = vld [vmem:[%s433] sm:$0xf]
        %v494 = vld [vmem:[%s433 + $0x4] sm:$0xf]
        %v495 = vld [vmem:[#allocation5] sm:$0xf]
        %v496 = vld [vmem:[#allocation5 + $0x4] sm:$0xf]
        %v497 = vld [vmem:[#allocation5 + $0x8] sm:$0xf]
        %v498 = vld [vmem:[#allocation5 + $0xc] sm:$0xf]
        %v499 = vld [vmem:[%s2] sm:$0x1]
        %v501 = vlaneseq
        %v502 = vshrl.u32 %v501, 7
        %v503 = vsub.s32 0, %v502
        %v504 = vrot.slane %v499, %v503
        %v508 = vunpack.c.l.b16 %v493
        %v509 = vunpack.c.l.b16 %v494
        %v510 = vpack.c.b16 %v509, %v508
        %v515 = vunpack.c.l.b16 %v495
        %v516 = vunpack.c.l.b16 %v496
        %v517 = vunpack.c.l.b16 %v497
        %v518 = vunpack.c.l.b16 %v498
        %v519 = vpack.c.b16 %v516, %v515
        %v520 = vpack.c.b16 %v518, %v517
        %vm523 = vcmask 261120
        %v525 = vsel %vm523, %v510, 0
        %527 = vmatprep.subr.bf16.mxu0 0
        %528 = vmatpush1.bf16.msra.mxu0 %v519
        %529 = vmatprep.subr.bf16.mxu0 0
        %530 = vmatpush1.bf16.msra.mxu0 %v520
        %531 = vmatprep.subr.bf16.mxu0 0
        %532 = vmatpush1.bf16.msra.mxu0 0
        %533 = vmatprep.subr.bf16.mxu0 0
        %534 = vmatpush1.bf16.msra.mxu0 0
        %535 = vmatprep.subr.bf16.mxu0 0
        %536 = vmatpush1.bf16.msra.mxu0 0
        %537 = vmatprep.subr.bf16.mxu0 0
        %538 = vmatpush1.bf16.msra.mxu0 0
        %539 = vmatprep.subr.bf16.mxu0 0
        %540 = vmatpush1.bf16.msra.mxu0 0
        %541 = vmatprep.subr.bf16.mxu0 0
        %542 = vmatpush1.bf16.msra.mxu0 0
        %543 = vmatprep.subr.bf16.mxu0 0
        %544 = vmatpush1.bf16.msra.mxu0 0
        %545 = vmatprep.subr.bf16.mxu0 0
        %546 = vmatpush1.bf16.msra.mxu0 0
        %547 = vmatprep.subr.bf16.mxu0 0
        %548 = vmatpush1.bf16.msra.mxu0 0
        %549 = vmatprep.subr.bf16.mxu0 0
        %550 = vmatpush1.bf16.msra.mxu0 0
        %551 = vmatprep.subr.bf16.mxu0 0
        %552 = vmatpush1.bf16.msra.mxu0 0
        %553 = vmatprep.subr.bf16.mxu0 0
        %554 = vmatpush1.bf16.msra.mxu0 0
        %555 = vmatprep.subr.bf16.mxu0 0
        %556 = vmatpush1.bf16.msra.mxu0 0
        %557 = vmatprep.subr.bf16.mxu0 0
        %558 = vmatpush1.bf16.msra.mxu0 0
        %559 = vmatprep.mubr.bf16.mxu0 0
        %560 = vmatmul.mubr.bf16.gmra.mrb[0].mxu0 %v525
        %v561 = vpop.f32.mrb[0].mxu0
        %v562 = vadd.f32 %v504, %v561
        %v563 = vpop.f32.mrb[0].mxu0
        %v564 = vpop.f32.mrb[0].mxu0
        %v565 = vadd.f32 %v504, %v564
        %v566 = vpop.f32.mrb[0].mxu0
        %567 = vdwg.mxu0
        %v568 = vld [vmem:[#allocation7] sm:$0xf]
        %v569 = vld [vmem:[#allocation7 + $0x4] sm:$0xf]
        %v570 = vld [vmem:[#allocation7 + $0x8] sm:$0xf]
        %v571 = vld [vmem:[#allocation7 + $0xc] sm:$0xf]
        %v572 = vld [vmem:[%s4] sm:$0x1]
        %v574 = vlaneseq
        %v575 = vshrl.u32 %v574, 7
        %v576 = vsub.s32 0, %v575
        %v577 = vrot.slane %v572, %v576
        %v583 = vunpack.c.l.b16 %v568
        %v584 = vunpack.c.l.b16 %v569
        %v585 = vunpack.c.l.b16 %v570
        %v586 = vunpack.c.l.b16 %v571
        %v587 = vpack.c.b16 %v584, %v583
        %v588 = vpack.c.b16 %v586, %v585
        %591 = vmatprep.subr.bf16.mxu0 0
        %592 = vmatpush1.bf16.msra.mxu0 %v587
        %593 = vmatprep.subr.bf16.mxu0 0
        %594 = vmatpush1.bf16.msra.mxu0 %v588
        %595 = vmatprep.subr.bf16.mxu0 0
        %596 = vmatpush1.bf16.msra.mxu0 0
        %597 = vmatprep.subr.bf16.mxu0 0
        %598 = vmatpush1.bf16.msra.mxu0 0
        %599 = vmatprep.subr.bf16.mxu0 0
        %600 = vmatpush1.bf16.msra.mxu0 0
        %601 = vmatprep.subr.bf16.mxu0 0
        %602 = vmatpush1.bf16.msra.mxu0 0
        %603 = vmatprep.subr.bf16.mxu0 0
        %604 = vmatpush1.bf16.msra.mxu0 0
        %605 = vmatprep.subr.bf16.mxu0 0
        %606 = vmatpush1.bf16.msra.mxu0 0
        %607 = vmatprep.subr.bf16.mxu0 0
        %608 = vmatpush1.bf16.msra.mxu0 0
        %609 = vmatprep.subr.bf16.mxu0 0
        %610 = vmatpush1.bf16.msra.mxu0 0
        %611 = vmatprep.subr.bf16.mxu0 0
        %612 = vmatpush1.bf16.msra.mxu0 0
        %613 = vmatprep.subr.bf16.mxu0 0
        %614 = vmatpush1.bf16.msra.mxu0 0
        %615 = vmatprep.subr.bf16.mxu0 0
        %616 = vmatpush1.bf16.msra.mxu0 0
        %617 = vmatprep.subr.bf16.mxu0 0
        %618 = vmatpush1.bf16.msra.mxu0 0
        %619 = vmatprep.subr.bf16.mxu0 0
        %620 = vmatpush1.bf16.msra.mxu0 0
        %621 = vmatprep.subr.bf16.mxu0 0
        %622 = vmatpush1.bf16.msra.mxu0 0
        %623 = vmatprep.mubr.bf16.mxu0 0
        %624 = vmatmul.mubr.bf16.gmra.mrb[0].mxu0 %v525
        %v625 = vpop.f32.mrb[0].mxu0
        %v626 = vadd.f32 %v577, %v625
        %v627 = vpop.f32.mrb[0].mxu0
        %v628 = vpop.f32.mrb[0].mxu0
        %v629 = vadd.f32 %v577, %v628
        %v630 = vpop.f32.mrb[0].mxu0
        %631 = vdwg.mxu0
        %v632 = vld [vmem:[%s5] sm:$0xf]
        %v633 = vld [vmem:[%s5 + $0x4] sm:$0xf]
        %v634 = vld [vmem:[%s5 + $0x8] sm:$0xf]
        %v635 = vld [vmem:[%s5 + $0xc] sm:$0xf]
        %v636 = vld [vmem:[%s6] sm:$0x1]
        %v638 = vlaneseq
        %v639 = vshrl.u32 %v638, 7
        %v640 = vsub.s32 0, %v639
        %v641 = vrot.slane %v636, %v640
        %v647 = vunpack.c.l.b16 %v632
        %v648 = vunpack.c.l.b16 %v633
        %v649 = vunpack.c.l.b16 %v634
        %v650 = vunpack.c.l.b16 %v635
        %v651 = vpack.c.b16 %v648, %v647
        %v652 = vpack.c.b16 %v650, %v649
        %655 = vmatprep.subr.bf16.mxu0 0
        %656 = vmatpush1.bf16.msra.mxu0 %v651
        %657 = vmatprep.subr.bf16.mxu0 0
        %658 = vmatpush1.bf16.msra.mxu0 %v652
        %659 = vmatprep.subr.bf16.mxu0 0
        %660 = vmatpush1.bf16.msra.mxu0 0
        %661 = vmatprep.subr.bf16.mxu0 0
        %662 = vmatpush1.bf16.msra.mxu0 0
        %663 = vmatprep.subr.bf16.mxu0 0
        %664 = vmatpush1.bf16.msra.mxu0 0
        %665 = vmatprep.subr.bf16.mxu0 0
        %666 = vmatpush1.bf16.msra.mxu0 0
        %667 = vmatprep.subr.bf16.mxu0 0
        %668 = vmatpush1.bf16.msra.mxu0 0
        %669 = vmatprep.subr.bf16.mxu0 0
        %670 = vmatpush1.bf16.msra.mxu0 0
        %671 = vmatprep.subr.bf16.mxu0 0
        %672 = vmatpush1.bf16.msra.mxu0 0
        %673 = vmatprep.subr.bf16.mxu0 0
        %674 = vmatpush1.bf16.msra.mxu0 0
        %675 = vmatprep.subr.bf16.mxu0 0
        %676 = vmatpush1.bf16.msra.mxu0 0
        %677 = vmatprep.subr.bf16.mxu0 0
        %678 = vmatpush1.bf16.msra.mxu0 0
        %679 = vmatprep.subr.bf16.mxu0 0
        %680 = vmatpush1.bf16.msra.mxu0 0
        %681 = vmatprep.subr.bf16.mxu0 0
        %682 = vmatpush1.bf16.msra.mxu0 0
        %683 = vmatprep.subr.bf16.mxu0 0
        %684 = vmatpush1.bf16.msra.mxu0 0
        %685 = vmatprep.subr.bf16.mxu0 0
        %686 = vmatpush1.bf16.msra.mxu0 0
        %687 = vmatprep.mubr.bf16.mxu0 0
        %688 = vmatmul.mubr.bf16.gmra.mrb[0].mxu0 %v525
        %v689 = vpop.f32.mrb[0].mxu0
        %v690 = vadd.f32 %v641, %v689
        %v691 = vpop.f32.mrb[0].mxu0
        %v692 = vpop.f32.mrb[0].mxu0
        %v693 = vadd.f32 %v641, %v692
        %v694 = vpop.f32.mrb[0].mxu0
        %695 = vdwg.mxu0
        %v696 = vrot.slane %v626, 7
        %v697 = vrot.slane %v629, 7
        %v698 = vlaneseq
        %v699 = vshrl.u32 %v698, 7
        %vm700 = vcmp.lt.s32.totalorder %v699, 1
        %v701 = vsel %vm700, %v696, %v697
        %v702 = vsel %vm700, %v697, %v696
        %v703 = vrot.slane %v626, 1
        %v704 = vrot.slane %v629, 1
        %vm705 = vcmp.lt.s32.totalorder %v699, 7
        %v706 = vsel %vm705, %v703, %v704
        %v707 = vsel %vm705, %v704, %v703
        %v708 = vrot.slane %v690, 7
        %v709 = vrot.slane %v693, 7
        %v710 = vsel %vm700, %v708, %v709
        %v711 = vsel %vm700, %v709, %v708
        %v712 = vrot.slane %v690, 1
        %v713 = vrot.slane %v693, 1
        %v714 = vsel %vm705, %v712, %v713
        %v715 = vsel %vm705, %v713, %v712
        %v716 = vmul.f32 %v562, %v702
        %v717 = vmul.f32 %v565, %v701
        %v718 = vsel %vm523, %v716, 0.0
        %719 = vadd.xlane.f32.xlu0 %v718
        %v720 = vpop.xlane.xlu0 %719
        %v721 = vsel %vm523, %v717, 0.0
        %722 = vadd.xlane.f32.xlu0 %v721
        %v723 = vpop.xlane.xlu0 %722
        %v724 = vmul.f32 %v562, %v626
        %v725 = vmul.f32 %v565, %v629
        %v726 = vsel %vm523, %v724, 0.0
        %727 = vadd.xlane.f32.xlu0 %v726
        %v728 = vpop.xlane.xlu0 %727
        %v729 = vsel %vm523, %v725, 0.0
        %730 = vadd.xlane.f32.xlu0 %v729
        %v731 = vpop.xlane.xlu0 %730
        %v732 = vmul.f32 %v562, %v706
        %v733 = vmul.f32 %v565, %v707
        %v734 = vsel %vm523, %v732, 0.0
        %735 = vadd.xlane.f32.xlu0 %v734
        %v736 = vpop.xlane.xlu0 %735
        %v737 = vsel %vm523, %v733, 0.0
        %738 = vadd.xlane.f32.xlu0 %v737
        %v739 = vpop.xlane.xlu0 %738
        %v740 = vadd.s32 %v699, 8
        %vm741 = vcmp.lt.s32.totalorder %v699, 0
        %v742 = vsub.s32 0, %v699
        %v743 = vsel %vm741, %v742, %v699
        %v744 = vshrl.u32 %v743, 3
        %v745 = vand.u32 %v743, 7
        %v746 = vsub.s32 0, %v745
        %v747 = vsel %vm741, %v746, %v745
        %vm748 = vcmp.lt.s32.totalorder %v740, 0
        %v749 = vsub.s32 0, %v740
        %v750 = vsel %vm748, %v749, %v740
        %v751 = vshrl.u32 %v750, 3
        %v752 = vand.u32 %v750, 7
        %v753 = vsub.s32 0, %v752
        %v754 = vsel %vm748, %v753, %v752
        %vm755 = vcmp.ne.s32.totalorder %v747, 0
        %vm756 = vcmp.ne.s32.totalorder %v754, 0
        %vm757 = vcmp.lt.s32.totalorder %v747, 0
        %vm758 = vcmp.lt.s32.totalorder %v754, 0
        %vm759 = vmand %vm757, %vm755
        %vm760 = vmand %vm758, %vm756
        %v761 = vadd.s32 %v747, 8
        %v762 = vadd.s32 %v754, 8
        %v763 = vsel %vm759, %v761, %v747
        %v764 = vsel %vm760, %v762, %v754
        %vm765 = vcmp.eq.s32.totalorder %v763, 0
        %vm766 = vcmp.eq.s32.totalorder %v764, 0
        %v767 = vsel %vm765, -inf, %v720
        %v768 = vsel %vm766, -inf, %v723
        %vm769 = vcmp.eq.s32.totalorder %v763, 7
        %vm770 = vcmp.eq.s32.totalorder %v764, 7
        %v771 = vsel %vm769, -inf, %v736
        %v772 = vsel %vm770, -inf, %v739
        %v773 = vmax.f32 %v767, %v771
        %v774 = vmax.f32 %v768, %v772
        %v775 = vmax.f32 %v773, %v728
        %v776 = vmax.f32 %v774, %v731
        %v777 = vsub.f32 %v767, %v775
        %v778 = vsub.f32 %v768, %v776
        %v779 = vmul.f32 %v777, 1.442695
        %v780 = vpow.pop %v779
        %v781 = vmul.f32 %v778, 1.442695
        %v782 = vpow.pop %v781
        %v783 = vsub.f32 %v728, %v775
        %v784 = vsub.f32 %v731, %v776
        %v785 = vmul.f32 %v783, 1.442695
        %v786 = vpow.pop %v785
        %v787 = vmul.f32 %v784, 1.442695
        %v788 = vpow.pop %v787
        %v789 = vsub.f32 %v771, %v775
        %v790 = vsub.f32 %v772, %v776
        %v791 = vmul.f32 %v789, 1.442695
        %v792 = vpow.pop %v791
        %v793 = vmul.f32 %v790, 1.442695
        %v794 = vpow.pop %v793
        %v795 = vadd.f32 %v780, %v786
        %v796 = vadd.f32 %v782, %v788
        %v797 = vadd.f32 %v795, %v792
        %v798 = vadd.f32 %v796, %v794
        %v799 = vrcp.pop %v797
        %v800 = vrcp.pop %v798
        %v801 = vmul.f32 %v780, %v799
        %v802 = vmul.f32 %v782, %v800
        %v803 = vmul.f32 %v801, %v711
        %v804 = vmul.f32 %v802, %v710
        %v805 = vmul.f32 %v786, %v799
        %v806 = vmul.f32 %v788, %v800
        %v807 = vmul.f32 %v805, %v690
        %v808 = vmul.f32 %v806, %v693
        %v809 = vadd.f32 %v803, %v807
        %v810 = vadd.f32 %v804, %v808
        %v811 = vmul.f32 %v792, %v799
        %v812 = vmul.f32 %v794, %v800
        %v813 = vmul.f32 %v811, %v714
        %v814 = vmul.f32 %v812, %v715
        %v815 = vadd.f32 %v809, %v813
        %v816 = vadd.f32 %v810, %v814
        %v817 = vpack.c.bf16 %v816, %v815
        %v818 = vld [vmem:[#allocation8] sm:$0xf]
        %v819 = vld [vmem:[#allocation8 + $0x4] sm:$0xf]
        %v820 = vld [vmem:[#allocation8 + $0x8] sm:$0xf]
        %v821 = vld [vmem:[#allocation8 + $0xc] sm:$0xf]
        %v822 = vld [vmem:[#allocation10] sm:$0xf]
        %v823 = vld [vmem:[#allocation10 + $0x4] sm:$0xf]
        %v824 = vld [vmem:[#allocation10 + $0x8] sm:$0xf]
        %v825 = vld [vmem:[#allocation10 + $0xc] sm:$0xf]
        %v830 = vunpack.c.l.b16 %v822
        %v831 = vunpack.c.l.b16 %v823
        %v832 = vunpack.c.l.b16 %v824
        %v833 = vunpack.c.l.b16 %v825
        %v834 = vpack.c.b16 %v831, %v830
        %v835 = vpack.c.b16 %v833, %v832
        %838 = vmatprep.subr.bf16.mxu0 0
        %839 = vmatpush1.bf16.msra.mxu0 %v834
        %840 = vmatprep.subr.bf16.mxu0 0
        %841 = vmatpush1.bf16.msra.mxu0 %v835
        %842 = vmatprep.subr.bf16.mxu0 0
        %843 = vmatpush1.bf16.msra.mxu0 0
        %844 = vmatprep.subr.bf16.mxu0 0
        %845 = vmatpush1.bf16.msra.mxu0 0
        %846 = vmatprep.subr.bf16.mxu0 0
        %847 = vmatpush1.bf16.msra.mxu0 0
        %848 = vmatprep.subr.bf16.mxu0 0
        %849 = vmatpush1.bf16.msra.mxu0 0
        %850 = vmatprep.subr.bf16.mxu0 0
        %851 = vmatpush1.bf16.msra.mxu0 0
        %852 = vmatprep.subr.bf16.mxu0 0
        %853 = vmatpush1.bf16.msra.mxu0 0
        %854 = vmatprep.subr.bf16.mxu0 0
        %855 = vmatpush1.bf16.msra.mxu0 0
        %856 = vmatprep.subr.bf16.mxu0 0
        %857 = vmatpush1.bf16.msra.mxu0 0
        %858 = vmatprep.subr.bf16.mxu0 0
        %859 = vmatpush1.bf16.msra.mxu0 0
        %860 = vmatprep.subr.bf16.mxu0 0
        %861 = vmatpush1.bf16.msra.mxu0 0
        %862 = vmatprep.subr.bf16.mxu0 0
        %863 = vmatpush1.bf16.msra.mxu0 0
        %864 = vmatprep.subr.bf16.mxu0 0
        %865 = vmatpush1.bf16.msra.mxu0 0
        %866 = vmatprep.subr.bf16.mxu0 0
        %867 = vmatpush1.bf16.msra.mxu0 0
        %868 = vmatprep.subr.bf16.mxu0 0
        %869 = vmatpush1.bf16.msra.mxu0 0
        %870 = vmatprep.mubr.bf16.mxu0 0
        %871 = vmatmul.mubr.bf16.gmra.mrb[0].mxu0 %v525
        %v872 = vpop.f32.mrb[0].mxu0
        %v873 = vadd.f32 0.0, %v872
        %v874 = vpop.f32.mrb[0].mxu0
        %v875 = vpop.f32.mrb[0].mxu0
        %v876 = vadd.f32 0.0, %v875
        %v877 = vpop.f32.mrb[0].mxu0
        %878 = vdwg.mxu0
        %v883 = vunpack.c.l.b16 %v818
        %v884 = vunpack.c.l.b16 %v819
        %v885 = vunpack.c.l.b16 %v820
        %v886 = vunpack.c.l.b16 %v821
        %v887 = vpack.c.b16 %v884, %v883
        %v888 = vpack.c.b16 %v886, %v885
        %v892 = vsel %vm523, %v817, 0
        %894 = vmatprep.subr.bf16.mxu0 0
        %895 = vmatpush1.bf16.msra.mxu0 %v887
        %896 = vmatprep.subr.bf16.mxu0 0
        %897 = vmatpush1.bf16.msra.mxu0 %v888
        %898 = vmatprep.subr.bf16.mxu0 0
        %899 = vmatpush1.bf16.msra.mxu0 0
        %900 = vmatprep.subr.bf16.mxu0 0
        %901 = vmatpush1.bf16.msra.mxu0 0
        %902 = vmatprep.subr.bf16.mxu0 0
        %903 = vmatpush1.bf16.msra.mxu0 0
        %904 = vmatprep.subr.bf16.mxu0 0
        %905 = vmatpush1.bf16.msra.mxu0 0
        %906 = vmatprep.subr.bf16.mxu0 0
        %907 = vmatpush1.bf16.msra.mxu0 0
        %908 = vmatprep.subr.bf16.mxu0 0
        %909 = vmatpush1.bf16.msra.mxu0 0
        %910 = vmatprep.subr.bf16.mxu0 0
        %911 = vmatpush1.bf16.msra.mxu0 0
        %912 = vmatprep.subr.bf16.mxu0 0
        %913 = vmatpush1.bf16.msra.mxu0 0
        %914 = vmatprep.subr.bf16.mxu0 0
        %915 = vmatpush1.bf16.msra.mxu0 0
        %916 = vmatprep.subr.bf16.mxu0 0
        %917 = vmatpush1.bf16.msra.mxu0 0
        %918 = vmatprep.subr.bf16.mxu0 0
        %919 = vmatpush1.bf16.msra.mxu0 0
        %920 = vmatprep.subr.bf16.mxu0 0
        %921 = vmatpush1.bf16.msra.mxu0 0
        %922 = vmatprep.subr.bf16.mxu0 0
        %923 = vmatpush1.bf16.msra.mxu0 0
        %924 = vmatprep.subr.bf16.mxu0 0
        %925 = vmatpush1.bf16.msra.mxu0 0
        %926 = vmatprep.mubr.bf16.mxu0 0
        %927 = vmatmul.mubr.bf16.gmra.mrb[0].mxu0 %v892
        %v928 = vpop.f32.mrb[0].mxu0
        %v929 = vadd.f32 %v873, %v928
        %v930 = vpop.f32.mrb[0].mxu0
        %v931 = vpop.f32.mrb[0].mxu0
        %v932 = vadd.f32 %v876, %v931
        %v933 = vpop.f32.mrb[0].mxu0
        %934 = vdwg.mxu0
        %v935 = vld [vmem:[%s9] sm:$0x1]
        %v937 = vlaneseq
        %v938 = vshrl.u32 %v937, 7
        %v939 = vsub.s32 0, %v938
        %v940 = vrot.slane %v935, %v939
        %v942 = vadd.f32 %v929, %v940
        %v943 = vadd.f32 %v932, %v940
        %944 = vadd.xlane.f32.xlu0 %v942
        %v945 = vpop.xlane.xlu0 %944
        %946 = vadd.xlane.f32.xlu0 %v943
        %v947 = vpop.xlane.xlu0 %946
        %v948 = vmul.f32 %v945, 0.083333336
        %v949 = vmul.f32 %v947, 0.083333336
        %v950 = vmul.f32 %v942, %v942
        %v951 = vmul.f32 %v943, %v943
        %952 = vadd.xlane.f32.xlu0 %v950
        %v953 = vpop.xlane.xlu0 %952
        %954 = vadd.xlane.f32.xlu0 %v951
        %v955 = vpop.xlane.xlu0 %954
        %v956 = vmul.f32 %v953, 0.083333336
        %v957 = vmul.f32 %v955, 0.083333336
        %v958 = vmul.f32 %v948, %v948
        %v959 = vmul.f32 %v949, %v949
        %v960 = vsub.f32 %v956, %v958
        %v961 = vsub.f32 %v957, %v959
        %v962 = vsub.f32 %v942, %v948
        %v963 = vsub.f32 %v943, %v949
        %v964 = vadd.f32 %v960, 1e-06
        %v965 = vadd.f32 %v961, 1e-06
        %v966 = vrsqrt.pop %v964
        %v967 = vrsqrt.pop %v965
        %v968 = vmul.f32 %v962, %v966
        %v969 = vmul.f32 %v963, %v967
        %v970 = vld [vmem:[%s10] sm:$0x1]
        %v972 = vlaneseq
        %v973 = vshrl.u32 %v972, 7
        %v974 = vsub.s32 0, %v973
        %v975 = vrot.slane %v970, %v974
        %v977 = vmul.f32 %v968, %v975
        %v978 = vmul.f32 %v969, %v975
        %v979 = vld [vmem:[%s11] sm:$0x1]
        %v981 = vlaneseq
        %v982 = vshrl.u32 %v981, 7
        %v983 = vsub.s32 0, %v982
        %v984 = vrot.slane %v979, %v983
        %v986 = vadd.f32 %v977, %v984
        %v987 = vadd.f32 %v978, %v984
        %v988 = vxor.u32 %v986, 2147483648
        %v989 = vxor.u32 %v987, 2147483648
        %v990 = vmul.f32 %v988, 1.442695
        %v991 = vpow.pop %v990
        %v992 = vmul.f32 %v989, 1.442695
        %v993 = vpow.pop %v992
        %v994 = vadd.f32 %v991, 1.0
        %v995 = vadd.f32 %v993, 1.0
        %v996 = vrcp.pop %v994
        %v997 = vmul.f32 1.0, %v996
        %v998 = vrcp.pop %v995
        %v999 = vmul.f32 1.0, %v998
        %1000 = vst [vmem:[%s489] sm:$0xff] %v997
        %1001 = vst [vmem:[%s489 + $0x8] sm:$0xff] %v999
        %s1002 = sand.u32 %s296, 1
        %s1003 = scalar_lea.sflag [#allocation4], %s1002
        %s1004 = sand.u32 %s296, 1
        %s1005 = smul.addr %s1004, 16
        %s1006 = scalar_lea.vmem [#allocation11], %s1005
        // Predicated region
        $region89: #{tpu_custom_call.1} parent=67 // pred_check
          %p1007 = pneg %p306
        $region90: #{tpu_custom_call.1} parent=67 // pred_check_branch
          %1009 = sbr.rel (%p1007) target = $region92
        $region91: #{tpu_custom_call.1} parent=67 // pred_region
          %s1010 = smul.u32 2, %s31
          %s1012 = ssub.s32 256, 256
          %1013 = vsyncadd %s1003, %s1012
          %s1014 = smul.addr %s1010, 128
          %s1015 = scalar_lea.hbm %s12, %s1014
          %s1016 = sshll.u32 %s1006, 4
          %s1017 = int_to_ptr.vmem [resolvable:$true] %s1016
          %1022 = dma.vmem_to_hbm [thread:$0]  %s1017, 256, %s1015, %s1003, 128, 128, 8
        $region92: #{tpu_custom_call.1} parent=67 // pred_fallthru
          _
      $region68: #{tpu_custom_call.1} parent=5 // pred_fallthru
        _
      %p1023 = scmp.le.s32.totalorder 2, %s26
      // Predicated region
      $region93: #{tpu_custom_call.1} parent=5 // pred_check
        %p1024 = pneg %p1023
      $region94: #{tpu_custom_call.1} parent=5 // pred_check_branch
        %1026 = sbr.rel (%p1024) target = $region96
      $region95: #{tpu_custom_call.1} parent=5 // pred_region
        %s1027 = ssub.s32 %s26, 2
        // Predicated region
        $region97: #{tpu_custom_call.1} parent=95 // pred_check
          %p1028 = pneg %p312
        $region98: #{tpu_custom_call.1} parent=95 // pred_check_branch
          %1030 = sbr.rel (%p1028) target = $region100
        $region99: #{tpu_custom_call.1} parent=95 // pred_region
          %s1031 = sand.u32 %s297, 1
          %s1032 = scalar_lea.sflag [#allocation4], %s1031
          %s1033 = sand.u32 %s297, 1
          %s1034 = smul.addr %s1033, 16
          %s1035 = scalar_lea.vmem [#allocation11], %s1034
          %1036 = dma.done %s1032, 256
        $region100: #{tpu_custom_call.1} parent=95 // pred_fallthru
          _
      $region96: #{tpu_custom_call.1} parent=5 // pred_fallthru
        _
    $region6: #{tpu_custom_call.1} parent=1 // loop_footer
      %s30 = sadd.s32 1, %s26
    $region7: #{tpu_custom_call.1} parent=1 // loop_footer_branch
      %25 = sbr.rel target = $region3
    $region8: #{tpu_custom_call.1} parent=1 // loop_exit
      _
    %1037 = vsyncpa [#allocation3], 1
    %s1038 = scalar_lea.sflag [#allocation3], 1
    %1039 = vsyncpa %s1038, 1
    %1040 = vsyncpa [#allocation6], 1
    %1041 = vsyncpa [#allocation9], 1
    %1042 = vsyncpa [#allocation4], 1
    %s1043 = scalar_lea.sflag [#allocation4], 1
    %1044 = vsyncpa %s1043, 1

</llo_original>
